<compile_context>
chip_gen: v5e
topology: v5e:2x2
jax: 0.10.0
libtpu: 0.0.40
codegen_flags: <defaults>
</compile_context>

<pallas_src>
import functools
import math

import jax
import jax.numpy as jnp
from jax import lax
from jax.experimental import pallas as pl
from jax.experimental.pallas import tpu as pltpu


# ---------------------------------------------------------------------------
# hardware / tiling helpers
# ---------------------------------------------------------------------------

def _chip_config():
    """(physical VMEM bytes, native MXU width) with conservative fallbacks."""
    kind = ""
    try:
        kind = jax.devices()[0].device_kind.lower()
    except Exception:
        pass
    phys = None
    try:
        phys = int(pltpu.get_tpu_info().vmem_capacity_bytes)
    except Exception:
        phys = None
    if phys is None:
        # v5e / v6e have 128 MiB per core; default conservatively to 64 MiB
        # (v7x) when the generation cannot be identified.
        phys = (128 << 20) if any(t in kind for t in ("v5", "v6")) else (64 << 20)
    # 128x128 native MXU on v5e and earlier, 256x256 on v6e / v7x.
    mxu = 256 if any(t in kind for t in ("v6", "v7")) else 128
    return phys, mxu


def _round_up(n, m):
    return -(-n // m) * m


def _pick_tile(n, target):
    """Largest tile t <= target that divides n and is sublane friendly."""
    if n <= target:
        return n
    for t in range(target, 0, -1):
        if n % t == 0 and t % 8 == 0:
            return t
    return n


def _attn_tiles(n, mxu):
    """(q_tile, kv_tile, padded N) for the flash grid."""
    if n % 8 == 0 and n <= 256:
        return n, n, n                          # single tile, no padding needed
    n_pad = _round_up(n, 128)
    tq = 128
    tk = 256 if (mxu >= 256 and n_pad % 256 == 0) else 128
    return tq, tk, n_pad


def _padded_tile_bytes(shape, itemsize):
    s = list(shape)
    if len(s) >= 1:
        s[-1] = _round_up(s[-1], 128)
    if len(s) >= 2:
        s[-2] = _round_up(s[-2], 8)
    return math.prod(s) * itemsize


def _vmem_limit(tile_specs, phys_bytes):
    """Scoped-VMEM request from the double-buffered tile footprint, capped at
    75% of the physical VMEM of the detected TPU generation."""
    need = sum(2 * _padded_tile_bytes(s, b) for s, b in tile_specs)
    need = int(1.3 * need) + (4 << 20)
    cap = (phys_bytes * 3) // 4
    return min(max(need, min(16 << 20, cap)), cap)


# ---------------------------------------------------------------------------
# kernel 1: QKV projection -> (3, M, inner), no HBM transpose afterwards
# ---------------------------------------------------------------------------

def _qkv_proj_kernel(x_ref, w_ref, o_ref, *, mxu_dtype):
    x = x_ref[...].astype(mxu_dtype)
    o_ref[...] = jnp.dot(x, w_ref[...],
                         preferred_element_type=jnp.float32).astype(o_ref.dtype)


def _qkv_projection(x_flat, w3, *, out_dtype, mxu_dtype, phys):
    """x_flat: (M, dim) f32; w3: (3, dim, inner) in the MXU dtype (softmax
    scale already folded into the Q section).  Returns (3, M, inner)."""
    M, dim = x_flat.shape
    _, _, inner = w3.shape
    tm = _pick_tile(M, 256)
    grid = (3, M // tm)                 # section (q/k/v) outer, row tiles inner

    out_itemsize = jnp.dtype(out_dtype).itemsize
    cost = pl.CostEstimate(
        flops=int(2 * M * dim * 3 * inner),
        transcendentals=0,
        bytes_accessed=int(3 * x_flat.size * x_flat.dtype.itemsize   # x per section
                           + w3.size * w3.dtype.itemsize
                           + 3 * M * inner * out_itemsize))
    vmem = _vmem_limit([((tm, dim), x_flat.dtype.itemsize),
                        ((dim, inner), w3.dtype.itemsize),
                        ((tm, inner), out_itemsize)], phys)

    return pl.pallas_call(
        functools.partial(_qkv_proj_kernel, mxu_dtype=mxu_dtype),
        out_shape=jax.ShapeDtypeStruct((3, M, inner), out_dtype),
        grid=grid,
        in_specs=[
            pl.BlockSpec((tm, dim), lambda s, i: (i, 0)),
            # per-section weight slab: 3x smaller VMEM residency than full Wqkv
            pl.BlockSpec((None, dim, inner), lambda s, i: (s, 0, 0)),
        ],
        out_specs=pl.BlockSpec((None, tm, inner), lambda s, i: (s, i, 0)),
        compiler_params=pltpu.CompilerParams(
            dimension_semantics=("parallel", "parallel"),
            vmem_limit_bytes=vmem),
        cost_estimate=cost,
    )(x_flat, w3)


# ---------------------------------------------------------------------------
# kernel 2: flash attention (all heads per step) + fused output projection
# ---------------------------------------------------------------------------

def _flash_out_kernel(q_ref, k_ref, v_ref, wo_ref, bo_ref, o_ref,
                      m_sc, l_sc, acc_sc, *, heads, dim_head, kv_tile,
                      n_real, n_pad, mxu_dtype, approx_recip):
    ki = pl.program_id(2)

    @pl.when(ki == 0)
    def _():
        # Finite (not -inf) init keeps a fully-masked block NaN-free.
        m_sc[...] = jnp.full(m_sc.shape, -1e30, m_sc.dtype)
        l_sc[...] = jnp.zeros(l_sc.shape, l_sc.dtype)
        acc_sc[...] = jnp.zeros(acc_sc.shape, acc_sc.dtype)

    d = dim_head
    mask_needed = n_pad != n_real                       # static Python bool
    if mask_needed:
        key_pos = ki * kv_tile + lax.broadcasted_iota(jnp.int32, (1, kv_tile), 1)
        key_valid = key_pos < n_real                    # (1, tk)

    # One online-softmax update per head; scale is already folded into Wq.
    for h in range(heads):
        q_h = q_ref[:, h * d:(h + 1) * d]               # (tq, d)
        k_h = k_ref[:, h * d:(h + 1) * d]               # (tk, d)
        v_h = v_ref[:, h * d:(h + 1) * d]               # (tk, d)
        s = lax.dot_general(q_h, k_h, (((1,), (1,)), ((), ())),
                            preferred_element_type=jnp.float32)   # (tq, tk)
        if mask_needed:
            s = jnp.where(key_valid, s, -1e30)
        m_prev = m_sc[h]                                # (tq, 1)
        m_new = jnp.maximum(m_prev, jnp.max(s, axis=-1, keepdims=True))
        alpha = jnp.exp(m_prev - m_new)                 # (tq, 1)
        p = jnp.exp(s - m_new)                          # f32, EUP
        l_sc[h] = alpha * l_sc[h] + jnp.sum(p, axis=-1, keepdims=True)
        acc_sc[h] = alpha * acc_sc[h] + jnp.dot(
            p.astype(mxu_dtype), v_h, preferred_element_type=jnp.float32)
        m_sc[h] = m_new

    @pl.when(ki == pl.num_programs(2) - 1)
    def _():
        # Normalize, concat heads lane-dense, then fuse the output projection
        # + bias so the (M, inner) attention output never hits HBM.
        pieces = []
        for h in range(heads):
            inv_l = pl.reciprocal(l_sc[h], approx=approx_recip)   # (tq, 1)
            pieces.append(acc_sc[h] * inv_l)
        attn = jnp.concatenate(pieces, axis=-1)                    # (tq, inner)
        y = jnp.dot(attn.astype(mxu_dtype), wo_ref[...],
                    preferred_element_type=jnp.float32)            # (tq, dim)
        o_ref[...] = (y + bo_ref[...].astype(jnp.float32)).astype(o_ref.dtype)


def _flash_attention_out(qkv, w_out, b_out, *, heads, dim_head, n_real,
                         tq, tk, mxu_dtype, approx_recip, phys):
    """qkv: (3, B, n_pad, inner).  Returns (B, n_pad, dim_out) f32 with the
    output projection and bias fused into the finalize step."""
    _, B, n_pad, inner = qkv.shape
    dim_out = w_out.shape[1]
    grid = (B, n_pad // tq, n_pad // tk)

    qkv_item = qkv.dtype.itemsize
    n_q_tiles = n_pad // tq
    cost = pl.CostEstimate(
        flops=int(4 * B * heads * n_pad * n_pad * dim_head
                  + 2 * B * n_pad * inner * dim_out),
        transcendentals=int(B * heads * n_pad * n_pad),
        bytes_accessed=int(B * n_pad * inner * qkv_item                     # Q once
                           + 2 * B * n_pad * inner * qkv_item * n_q_tiles   # K,V per q tile
                           + w_out.size * w_out.dtype.itemsize
                           + b_out.size * b_out.dtype.itemsize
                           + B * n_pad * dim_out * 4))                      # output write
    vmem = _vmem_limit([
        ((tq, inner), qkv_item), ((tk, inner), qkv_item), ((tk, inner), qkv_item),
        ((inner, dim_out), w_out.dtype.itemsize), ((1, dim_out), 4),
        ((tq, dim_out), 4),
        ((heads, tq, 1), 4), ((heads, tq, 1), 4), ((heads, tq, dim_head), 4),
    ], phys)

    kernel = functools.partial(
        _flash_out_kernel, heads=heads, dim_head=dim_head, kv_tile=tk,
        n_real=n_real, n_pad=n_pad, mxu_dtype=mxu_dtype,
        approx_recip=approx_recip)

    return pl.pallas_call(
        kernel,
        out_shape=jax.ShapeDtypeStruct((B, n_pad, dim_out), jnp.float32),
        grid=grid,
        in_specs=[
            # q / k / v are read straight out of the (3, B, N, inner) QKV
            # projection output -- no HBM transpose anywhere.
            pl.BlockSpec((None, None, tq, inner), lambda b, qi, ki: (0, b, qi, 0)),
            pl.BlockSpec((None, None, tk, inner), lambda b, qi, ki: (1, b, ki, 0)),
            pl.BlockSpec((None, None, tk, inner), lambda b, qi, ki: (2, b, ki, 0)),
            pl.BlockSpec((inner, dim_out), lambda b, qi, ki: (0, 0)),   # Wout resident
            pl.BlockSpec((1, dim_out), lambda b, qi, ki: (0, 0)),       # bias
        ],
        out_specs=pl.BlockSpec((None, tq, dim_out), lambda b, qi, ki: (b, qi, 0)),
        scratch_shapes=[
            pltpu.VMEM((heads, tq, 1), jnp.float32),         # running max m
            pltpu.VMEM((heads, tq, 1), jnp.float32),         # running denom l
            pltpu.VMEM((heads, tq, dim_head), jnp.float32),  # per-head f32 acc
        ],
        compiler_params=pltpu.CompilerParams(
            dimension_semantics=("parallel", "parallel", "arbitrary"),
            vmem_limit_bytes=vmem),
        cost_estimate=cost,
    )(qkv, qkv, qkv, w_out, b_out)


# ---------------------------------------------------------------------------
# full forward
# ---------------------------------------------------------------------------

def attention_forward(x, w_qkv_t, w_out_t, b_out, *, heads, dim_head,
                      mxu_dtype=jnp.bfloat16):
    """x: (B, N, dim) f32.  Weights pre-transposed to (in, out) layout.
    Matches Attention.forward at inference (Dropout(p=0) == identity)."""
    B, N, dim = x.shape
    inner = heads * dim_head
    scale = dim_head ** (-0.5)
    f32_exact = (jnp.dtype(mxu_dtype) == jnp.dtype(jnp.float32))

    phys, mxu = _chip_config()
    tq, tk, n_pad = _attn_tiles(N, mxu)

    # --- weight prep (O(weights) only, once per call) ----------------------
    # (dim, 3*inner) -> (3, dim, inner) with the softmax scale folded into Wq.
    w3 = w_qkv_t.reshape(dim, 3, inner).transpose(1, 0, 2)
    w3 = w3.at[0].multiply(scale).astype(mxu_dtype)
    w_out_m = w_out_t.astype(mxu_dtype)
    b_out2 = b_out.reshape(1, dim).astype(jnp.float32)

    # --- pad N up to an (8,128)-friendly length if needed ------------------
    if n_pad != N:
        x = jnp.pad(x, ((0, 0), (0, n_pad - N), (0, 0)))
    x_flat = x.reshape(B * n_pad, dim)

    # 1) QKV projection -> (3, B*n_pad, inner) in the MXU dtype.
    qkv = _qkv_projection(x_flat, w3, out_dtype=mxu_dtype,
                          mxu_dtype=mxu_dtype, phys=phys)
    qkv = qkv.reshape(3, B, n_pad, inner)        # metadata-only reshape

    # 2) flash attention over all heads per step, output projection fused.
    y = _flash_attention_out(qkv, w_out_m, b_out2, heads=heads,
                             dim_head=dim_head, n_real=N, tq=tq, tk=tk,
                             mxu_dtype=mxu_dtype,
                             approx_recip=not f32_exact, phys=phys)
    if n_pad != N:
        y = y[:, :N, :]
    # TODO(synk): training-mode Dropout (p>0) and the project_out=False
    # Identity branch (heads==1 and dim_head==dim) are not implemented.
    return y


def attention_reference(x, w_qkv_t, w_out_t, b_out, *, heads, dim_head):
    """Pure-JAX f32 reference mirroring the PyTorch forward exactly."""
    B, N, dim = x.shape
    inner = heads * dim_head
    scale = dim_head ** (-0.5)
    qkv = x @ w_qkv_t
    q, k, v = jnp.split(qkv, 3, axis=-1)

    def to_heads(t):
        return t.reshape(B, N, heads, dim_head).transpose(0, 2, 1, 3)

    q, k, v = map(to_heads, (q, k, v))
    dots = jnp.einsum('bhnd,bhmd->bhnm', q, k) * scale
    attn = jax.nn.softmax(dots, axis=-1)
    out = jnp.einsum('bhnm,bhmd->bhnd', attn, v)
    out = out.transpose(0, 2, 1, 3).reshape(B, N, inner)
    return out @ w_out_t + b_out


if __name__ == "__main__":
    heads, dim_head = 4, 16
    inner = heads * dim_head
    dim = 32

    key = jax.random.PRNGKey(0)
    kx, kqkv, kwo, kbo, kx2 = jax.random.split(key, 5)

    w_qkv_t = jax.random.normal(kqkv, (dim, 3 * inner), jnp.float32) * (dim ** -0.5)
    w_out_t = jax.random.normal(kwo, (inner, dim), jnp.float32) * (inner ** -0.5)
    b_out = jax.random.normal(kbo, (1, dim), jnp.float32) * 0.01

    # --- case 1: tile-aligned sequence length -------------------------------
    B, N = 2, 8
    x = jax.random.normal(kx, (B, N, dim), jnp.float32)
    ref = attention_reference(x, w_qkv_t, w_out_t, b_out,
                              heads=heads, dim_head=dim_head)

    out_f32 = jax.block_until_ready(
        attention_forward(x, w_qkv_t, w_out_t, b_out, heads=heads,
                          dim_head=dim_head, mxu_dtype=jnp.float32))
    assert out_f32.shape == (B, N, dim)
    assert jnp.allclose(out_f32, ref, atol=2e-4, rtol=2e-4), \
        "f32 Pallas output mismatch vs reference"

    out_bf16 = jax.block_until_ready(
        attention_forward(x, w_qkv_t, w_out_t, b_out, heads=heads,
                          dim_head=dim_head, mxu_dtype=jnp.bfloat16))
    assert out_bf16.shape == (B, N, dim)
    assert jnp.allclose(out_bf16, ref, atol=1e-1, rtol=1e-1), \
        "bf16 Pallas output diverged from reference"

    # --- case 2: non-aligned N exercises the pad + key-mask path ------------
    B2, N2 = 2, 12
    x2 = jax.random.normal(kx2, (B2, N2, dim), jnp.float32)
    ref2 = attention_reference(x2, w_qkv_t, w_out_t, b_out,
                               heads=heads, dim_head=dim_head)
    out2 = jax.block_until_ready(
        attention_forward(x2, w_qkv_t, w_out_t, b_out, heads=heads,
                          dim_head=dim_head, mxu_dtype=jnp.float32))
    assert out2.shape == (B2, N2, dim)
    assert jnp.allclose(out2, ref2, atol=2e-4, rtol=2e-4), \
        "padded-N Pallas output mismatch vs reference"

    print("KERNEL_OK")
</pallas_src>

<mosaic_0001>
module attributes {stable_mosaic.version = 11 : i64} {
  func.func @_qkv_proj_kernel(%arg0: i32, %arg1: i32, %arg2: memref<16x32xf32, #tpu.memory_space<vmem>>, %arg3: memref<1x32x64xf32, #tpu.memory_space<vmem>>, %arg4: memref<1x16x64xf32, #tpu.memory_space<vmem>>) attributes {dimension_semantics = [#tpu.dimension_semantics<parallel>, #tpu.dimension_semantics<parallel>], iteration_bounds = array<i64: 3, 1>, scalar_prefetch = 0 : i64, scratch_operands = 0 : i64, tpu.core_type = #tpu.core_type<tc>, window_params = [{transform_indices = @transform_0, window_bounds = array<i64: 16, 32>}, {transform_indices = @transform_1, window_bounds = array<i64: 1, 32, 64>}, {transform_indices = @transform_2, window_bounds = array<i64: 1, 16, 64>}]} {
    %c0 = arith.constant 0 : index
    %c0_0 = arith.constant 0 : index
    %0 = vector.load %arg2[%c0, %c0_0] : memref<16x32xf32, #tpu.memory_space<vmem>>, vector<16x32xf32>
    %c0_1 = arith.constant 0 : index
    %c0_2 = arith.constant 0 : index
    %c0_3 = arith.constant 0 : index
    %1 = vector.load %arg3[%c0_1, %c0_2, %c0_3] : memref<1x32x64xf32, #tpu.memory_space<vmem>>, vector<1x32x64xf32>
    %2 = vector.shape_cast %1 : vector<1x32x64xf32> to vector<32x64xf32>
    %cst = arith.constant dense<0.000000e+00> : vector<16x64xf32>
    %3 = tpu.matmul %0, %2, %cst {dimension_numbers = #tpu.dot_dimension_numbers<[1], [0], [0], [1], [0, 0, 1, 1], [], []>} : vector<16x32xf32>, vector<32x64xf32>, vector<16x64xf32> -> vector<16x64xf32>
    %c0_4 = arith.constant 0 : index
    %c0_5 = arith.constant 0 : index
    %c0_6 = arith.constant 0 : index
    %4 = vector.load %arg4[%c0_4, %c0_5, %c0_6] : memref<1x16x64xf32, #tpu.memory_space<vmem>>, vector<1x16x64xf32>
    %5 = vector.shape_cast %4 : vector<1x16x64xf32> to vector<16x64xf32>
    %6 = vector.shape_cast %3 : vector<16x64xf32> to vector<1x16x64xf32>
    tpu.vector_store %arg4[%c0_4, %c0_5, %c0_6], %6 {strides = array<i32>} : memref<1x16x64xf32, #tpu.memory_space<vmem>>, vector<1x16x64xf32>,
    return
  }
  func.func @transform_0(%arg0: i32, %arg1: i32) -> (i32, i32) {
    %c0_i32 = arith.constant 0 : i32
    %c0_i32_0 = arith.constant 0 : i32
    return %arg1, %c0_i32 : i32, i32
  }
  func.func @transform_1(%arg0: i32, %arg1: i32) -> (i32, i32, i32) {
    %c0_i32 = arith.constant 0 : i32
    %c0_i32_0 = arith.constant 0 : i32
    %c0_i32_1 = arith.constant 0 : i32
    return %arg0, %c0_i32, %c0_i32_0 : i32, i32, i32
  }
  func.func @transform_2(%arg0: i32, %arg1: i32) -> (i32, i32, i32) {
    %c0_i32 = arith.constant 0 : i32
    %c0_i32_0 = arith.constant 0 : i32
    return %arg0, %arg1, %c0_i32 : i32, i32, i32
  }
}

</mosaic_0001>

<llo_original>
// kernel: tpu_custom_call.1
$region0: #{tpu_custom_call.1}
  #allocation0 [shape = 'u32[]', space=smem, size = 0x4, offset = 0x4, fixed_abs, tag = 'smem constant byte address 0x4 - core index']
  #allocation1 [shape = 'u32[72,128]{1,0:T(1,128)}', space=vmem, size = 0x9000, scoped, tag = 'internal scratch']
  %s0 = inlined_call_operand.hbm [shape: f32[16,32], index: 0, kind: input, shape index: {}]
  %s1 = inlined_call_operand.hbm [shape: f32[3,32,64], index: 1, kind: input, shape index: {}]
  %s2 = inlined_call_operand.hbm [shape: f32[3,16,64], index: 2, kind: output, shape index: {}]
  %s3 = sld [smem:[#allocation0]]
  $region49: #{tpu_custom_call.1} parent=0
    _
  %s5 = ssub.s32 1, %s3
  %s6 = scalar_select 0, %s5, %s3
  $region1: #{tpu_custom_call.1} parent=0
    #allocation2 [shape = 'u8[8192]{0}', space=vmem, size = 0x2000, scoped, tag = 'input window, operand 0, single buffered']
    #allocation3 [shape = 's32[2]{0}', space=sflag, size = 0x8, scoped, tag = 'scoped memory for tpu_custom_call.1']
    #allocation4 [shape = 's32[2]{0}', space=sflag, size = 0x8, scoped, tag = 'scoped memory for tpu_custom_call.1']
    #allocation5 [shape = 'u8[32768]{0}', space=vmem, size = 0x8000, scoped, tag = 'input window, operand 1']
    #allocation6 [shape = 's32[2]{0}', space=sflag, size = 0x8, scoped, tag = 'scoped memory for tpu_custom_call.1']
    #allocation7 [shape = 'u8[16384]{0}', space=vmem, size = 0x4000, scoped, tag = 'output window, operand 0']
    %7 = vsyncpa [#allocation3], 0
    %8 = vsyncpa [#allocation6], 0
    %s9 = scalar_lea.sflag [#allocation6], 1
    %10 = vsyncpa %s9, 0
    %11 = vsyncpa [#allocation4], 0
    %s12 = scalar_lea.sflag [#allocation4], 1
    %13 = vsyncpa %s12, 0
    loop: start=0, step=1, limit=5
    $region2: #{tpu_custom_call.1} parent=1 // loop_pre_header
      _
    $region3: #{tpu_custom_call.1} parent=1 // loop_header
      %s15 = sphi 0, %s19
      %p16 = scmp.ge.s32.totalorder %s15, 5
      %s22 = sphi 0, %s34
      %s23 = sphi 0, %s30
      %s24 = sphi 0, %s22
      %s25 = sphi 0, %s23
      %s26 = sphi 0, %s24
      %s27 = sphi 0, %s25
      %s37 = sphi 0, %s39
      %s40 = sphi 0, %s37
      %s41 = sphi 0, %s40
      %s57 = sphi 0, %s41
      %s63 = sphi 0, %s65
      %s66 = sphi 0, %s63
      %s67 = sphi 0, %s66
      %s83 = sphi 0, %s67
      %s91 = sphi 0, %s93
      %s94 = sphi 0, %s91
      %s95 = sphi 0, %s94
      %s111 = sphi 0, %s95
    $region4: #{tpu_custom_call.1} parent=1 // loop_header_branch
      %18 = sbr.rel (%p16) target = $region8
    $region5: #{tpu_custom_call.1} parent=1 // loop_body
      %s20 = ssub.s32 %s15, 1
      %s21 = ssub.s32 %s15, 2
      %s28 = sadd.s32 1, %s23
      %p29 = scmp.ge.s32.totalorder %s28, 1
      %s30 = scalar_select %p29, 0, %s28
      %s31 = sadd.s32 1, %s22
      %s32 = scalar_select %p29, %s31, %s22
      %p33 = scmp.ge.s32.totalorder %s32, 3
      %s34 = scalar_select %p33, 0, %s32
      %s35 = ssub.s32 %s23, %s30
      %p36 = scmp.eq.s32.totalorder %s35, 0
      %s38 = sadd.s32 %s37, 1
      %s39 = scalar_select %p36, %s37, %s38
      %p42 = pneg %p36
      %p43 = scmp.eq.s32.totalorder %s15, 2
      %p44 = por %p42, %p43
      %p45 = scmp.ne.s32.totalorder %s37, %s40
      %p46 = scmp.eq.s32.totalorder %s15, 0
      %p47 = por %p45, %p46
      %p48 = scmp.ne.s32.totalorder %s37, %s40
      %p49 = scmp.eq.s32.totalorder %s20, 2
      %p50 = por %p48, %p49
      %p51 = scmp.ne.s32.totalorder %s40, %s41
      %p52 = scmp.eq.s32.totalorder %s20, 0
      %p53 = por %p51, %p52
      %p54 = scmp.ne.s32.totalorder %s40, %s41
      %p55 = scmp.eq.s32.totalorder %s21, 2
      %p56 = por %p54, %p55
      %p58 = scmp.ne.s32.totalorder %s41, %s57
      %p59 = scmp.eq.s32.totalorder %s21, 0
      %p60 = por %p58, %p59
      %s61 = ssub.s32 %s22, %s34
      %p62 = scmp.eq.s32.totalorder %s61, 0
      %s64 = sadd.s32 %s63, 1
      %s65 = scalar_select %p62, %s63, %s64
      %p68 = pneg %p62
      %p69 = scmp.eq.s32.totalorder %s15, 2
      %p70 = por %p68, %p69
      %p71 = scmp.ne.s32.totalorder %s63, %s66
      %p72 = scmp.eq.s32.totalorder %s15, 0
      %p73 = por %p71, %p72
      %p74 = scmp.ne.s32.totalorder %s63, %s66
      %p75 = scmp.eq.s32.totalorder %s20, 2
      %p76 = por %p74, %p75
      %p77 = scmp.ne.s32.totalorder %s66, %s67
      %p78 = scmp.eq.s32.totalorder %s20, 0
      %p79 = por %p77, %p78
      %p80 = scmp.ne.s32.totalorder %s66, %s67
      %p81 = scmp.eq.s32.totalorder %s21, 2
      %p82 = por %p80, %p81
      %p84 = scmp.ne.s32.totalorder %s67, %s83
      %p85 = scmp.eq.s32.totalorder %s21, 0
      %p86 = por %p84, %p85
      %s87 = ssub.s32 %s22, %s34
      %s88 = ssub.s32 %s23, %s30
      %s89 = sor.u32 %s87, %s88
      %p90 = scmp.eq.s32.totalorder %s89, 0
      %s92 = sadd.s32 %s91, 1
      %s93 = scalar_select %p90, %s91, %s92
      %p96 = pneg %p90
      %p97 = scmp.eq.s32.totalorder %s15, 2
      %p98 = por %p96, %p97
      %p99 = scmp.ne.s32.totalorder %s91, %s94
      %p100 = scmp.eq.s32.totalorder %s15, 0
      %p101 = por %p99, %p100
      %p102 = scmp.ne.s32.totalorder %s91, %s94
      %p103 = scmp.eq.s32.totalorder %s20, 2
      %p104 = por %p102, %p103
      %p105 = scmp.ne.s32.totalorder %s94, %s95
      %p106 = scmp.eq.s32.totalorder %s20, 0
      %p107 = por %p105, %p106
      %p108 = scmp.ne.s32.totalorder %s94, %s95
      %p109 = scmp.eq.s32.totalorder %s21, 2
      %p110 = por %p108, %p109
      %p112 = scmp.ne.s32.totalorder %s95, %s111
      %p113 = scmp.eq.s32.totalorder %s21, 0
      %p114 = por %p112, %p113
      %p115 = scmp.le.s32.totalorder 1, %s15
      %p116 = scmp.lt.s32.totalorder %s15, 4
      %p117 = pnand %p115, %p116
      %p118 = pneg %p117
      // Predicated region
      $region9: #{tpu_custom_call.1} parent=5 // pred_check
        _
      $region10: #{tpu_custom_call.1} parent=5 // pred_check_branch
        %120 = sbr.rel (%p117) target = $region12
      $region11: #{tpu_custom_call.1} parent=5 // pred_region
        %s121 = ssub.s32 %s15, 1
        // Predicated region
        $region13: #{tpu_custom_call.1} parent=11 // pred_check
          %p122 = pneg %p53
        $region14: #{tpu_custom_call.1} parent=11 // pred_check_branch
          %124 = sbr.rel (%p122) target = $region16
        $region15: #{tpu_custom_call.1} parent=11 // pred_region
          %s125 = smul.u32 2, %s25
          %127 = vsyncadd [#allocation3], 0
          %s128 = smul.addr %s125, 8
          %s129 = scalar_lea.hbm %s0, %s128
          %s130 = sshll.u32 %s129, 4
          %s131 = int_to_ptr.hbm [resolvable:$true] %s130
          %s132 = sshll.u32 [#allocation2], 4
          %s133 = int_to_ptr.vmem [resolvable:$true] %s132
          %138 = dma.hbm_to_vmem [thread:$0]  %s131, 256, %s133, [#allocation3], 128, 128, 8
        $region16: #{tpu_custom_call.1} parent=11 // pred_fallthru
          _
      $region12: #{tpu_custom_call.1} parent=5 // pred_fallthru
        _
      %p139 = scmp.lt.s32.totalorder %s15, 3
      // Predicated region
      $region17: #{tpu_custom_call.1} parent=5 // pred_check
        %p140 = pneg %p139
      $region18: #{tpu_custom_call.1} parent=5 // pred_check_branch
        %142 = sbr.rel (%p140) target = $region20
      $region19: #{tpu_custom_call.1} parent=5 // pred_region
        // Predicated region
        $region21: #{tpu_custom_call.1} parent=19 // pred_check
          %p143 = pneg %p73
        $region22: #{tpu_custom_call.1} parent=19 // pred_check_branch
          %145 = sbr.rel (%p143) target = $region24
        $region23: #{tpu_custom_call.1} parent=19 // pred_region
          %s146 = sand.u32 %s63, 1
          %s147 = scalar_lea.sflag [#allocation6], %s146
          %s148 = sand.u32 %s63, 1
          %s149 = smul.addr %s148, 32
          %s150 = scalar_lea.vmem [#allocation5], %s149
          %152 = vsyncadd %s147, 0
          %s153 = smul.addr %s22, 4
          %s154 = smul.addr %s153, 8
          %s155 = scalar_lea.hbm %s1, %s154
          %s156 = sshll.u32 %s155, 4
          %s157 = int_to_ptr.hbm [resolvable:$true] %s156
          %s158 = sshll.u32 %s150, 4
          %s159 = int_to_ptr.vmem [resolvable:$true] %s158
          %164 = dma.hbm_to_vmem [thread:$0]  %s157, 512, %s159, %s147, 128, 128, 8
        $region24: #{tpu_custom_call.1} parent=19 // pred_fallthru
          _
      $region20: #{tpu_custom_call.1} parent=5 // pred_fallthru
        _
      %p165 = scmp.le.s32.totalorder 1, %s15
      %p166 = scmp.lt.s32.totalorder %s15, 4
      %p167 = pnand %p165, %p166
      %p168 = pneg %p167
      // Predicated region
      $region25: #{tpu_custom_call.1} parent=5 // pred_check
        _
      $region26: #{tpu_custom_call.1} parent=5 // pred_check_branch
        %170 = sbr.rel (%p167) target = $region28
      $region27: #{tpu_custom_call.1} parent=5 // pred_region
        %s171 = ssub.s32 %s15, 1
        // Predicated region
        $region29: #{tpu_custom_call.1} parent=27 // pred_check
          %p172 = pneg %p53
        $region30: #{tpu_custom_call.1} parent=27 // pred_check_branch
          %174 = sbr.rel (%p172) target = $region32
        $region31: #{tpu_custom_call.1} parent=27 // pred_region
          %176 = dma.done [#allocation3], 256
        $region32: #{tpu_custom_call.1} parent=27 // pred_fallthru
          _
        %s177 = sand.u32 %s66, 1
        %s178 = scalar_lea.sflag [#allocation6], %s177
        %s179 = sand.u32 %s66, 1
        %s180 = smul.addr %s179, 32
        %s181 = scalar_lea.vmem [#allocation5], %s180
        // Predicated region
        $region33: #{tpu_custom_call.1} parent=27 // pred_check
          %p182 = pneg %p79
        $region34: #{tpu_custom_call.1} parent=27 // pred_check_branch
          %184 = sbr.rel (%p182) target = $region36
        $region35: #{tpu_custom_call.1} parent=27 // pred_region
          %186 = dma.done %s178, 512
        $region36: #{tpu_custom_call.1} parent=27 // pred_fallthru
          _
        %p187 = pneg %p53
        %p188 = pneg %p50
        %s189 = sand.u32 %s66, 1
        %s190 = scalar_lea.sflag [#allocation6], %s189
        %s191 = sand.u32 %s66, 1
        %s192 = smul.addr %s191, 32
        %s193 = scalar_lea.vmem [#allocation5], %s192
        %p194 = pneg %p79
        %p195 = pneg %p76
        %p196 = pneg %p107
        %p197 = pneg %p104
        %s198 = sand.u32 %s94, 1
        %s199 = scalar_lea.sflag [#allocation4], %s198
        %s200 = sand.u32 %s94, 1
        %s201 = smul.addr %s200, 16
        %s202 = scalar_lea.vmem [#allocation7], %s201
        %s203 = smul.u32 2, %s25
        %s204 = smul.u32 2, %s25
        %v205 = vld [vmem:[#allocation2] sm:$0xff]
        %v206 = vld [vmem:[#allocation2 + $0x8] sm:$0xff]
        %v207 = vld [vmem:[%s181] sm:$0xff]
        %v208 = vld [vmem:[%s181 + $0x8] sm:$0xff]
        %v209 = vld [vmem:[%s181 + $0x10] sm:$0xff]
        %v210 = vld [vmem:[%s181 + $0x18] sm:$0xff]
        %vm211 = vcmask 261120
        %v213 = vsel %vm211, %v205, 0
        %v216 = vsel %vm211, %v206, 0
        %218 = vmatpush.msra.mxu0 0.0
        %219 = vmatpush.msra.mxu0 0.0
        %220 = vmatpush.msra.mxu0 0.0
        %221 = vmatpush.msra.mxu0 0.0
        %222 = vmatpush.msra.mxu0 0.0
        %223 = vmatpush.msra.mxu0 0.0
        %224 = vmatpush.msra.mxu0 0.0
        %225 = vmatpush.msra.mxu0 0.0
        %226 = vmatpush.msra.mxu0 0.0
        %227 = vmatpush.msra.mxu0 0.0
        %228 = vmatpush.msra.mxu0 0.0
        %229 = vmatpush.msra.mxu0 0.0
        %230 = vmatpush.msra.mxu0 %v210
        %231 = vmatpush.msra.mxu0 %v209
        %232 = vmatpush.msra.mxu0 %v208
        %233 = vmatpush.msra.mxu0 %v207
        %234 = vmatmul.f32.gmra.mxu0 %v213
        %v235 = vpop.f32.mrf.mxu0
        %v236 = vadd.f32 0.0, %v235
        %237 = vmatmul.f32.gmra.mxu0 %v216
        %v238 = vpop.f32.mrf.mxu0
        %v239 = vadd.f32 0.0, %v238
        %240 = vdwg.mxu0
        %vm241 = vcmask 523264
        %242 = vst.msk [vmem:[%s202] sm:$0xff] %vm241, %v236
        %243 = vst.msk [vmem:[%s202 + $0x8] sm:$0xff] %vm241, %v239
        %s244 = sand.u32 %s94, 1
        %s245 = scalar_lea.sflag [#allocation4], %s244
        %s246 = sand.u32 %s94, 1
        %s247 = smul.addr %s246, 16
        %s248 = scalar_lea.vmem [#allocation7], %s247
        // Predicated region
        $region37: #{tpu_custom_call.1} parent=27 // pred_check
          %p249 = pneg %p104
        $region38: #{tpu_custom_call.1} parent=27 // pred_check_branch
          %251 = sbr.rel (%p249) target = $region40
        $region39: #{tpu_custom_call.1} parent=27 // pred_region
          %s252 = smul.u32 2, %s25
          %254 = vsyncadd %s245, 0
          %s255 = smul.addr %s24, 2
          %s256 = sadd.s32 %s252, %s255
          %s257 = smul.addr %s256, 8
          %s258 = scalar_lea.hbm %s2, %s257
          %s259 = sshll.u32 %s248, 4
          %s260 = int_to_ptr.vmem [resolvable:$true] %s259
          %s261 = sshll.u32 %s258, 4
          %s262 = int_to_ptr.hbm [resolvable:$true] %s261
          %267 = dma.vmem_to_hbm [thread:$0]  %s260, 256, %s262, %s245, 128, 128, 8
        $region40: #{tpu_custom_call.1} parent=27 // pred_fallthru
          _
      $region28: #{tpu_custom_call.1} parent=5 // pred_fallthru
        _
      %p268 = scmp.le.s32.totalorder 2, %s15
      // Predicated region
      $region41: #{tpu_custom_call.1} parent=5 // pred_check
        %p269 = pneg %p268
      $region42: #{tpu_custom_call.1} parent=5 // pred_check_branch
        %271 = sbr.rel (%p269) target = $region44
      $region43: #{tpu_custom_call.1} parent=5 // pred_region
        %s272 = ssub.s32 %s15, 2
        // Predicated region
        $region45: #{tpu_custom_call.1} parent=43 // pred_check
          %p273 = pneg %p110
        $region46: #{tpu_custom_call.1} parent=43 // pred_check_branch
          %275 = sbr.rel (%p273) target = $region48
        $region47: #{tpu_custom_call.1} parent=43 // pred_region
          %s276 = sand.u32 %s95, 1
          %s277 = scalar_lea.sflag [#allocation4], %s276
          %s278 = sand.u32 %s95, 1
          %s279 = smul.addr %s278, 16
          %s280 = scalar_lea.vmem [#allocation7], %s279
          %282 = dma.done %s277, 256
        $region48: #{tpu_custom_call.1} parent=43 // pred_fallthru
          _
      $region44: #{tpu_custom_call.1} parent=5 // pred_fallthru
        _
    $region6: #{tpu_custom_call.1} parent=1 // loop_footer
      %s19 = sadd.s32 1, %s15
    $region7: #{tpu_custom_call.1} parent=1 // loop_footer_branch
      %14 = sbr.rel target = $region3
    $region8: #{tpu_custom_call.1} parent=1 // loop_exit
      _
    %283 = vsyncpa [#allocation3], 1
    %s284 = scalar_lea.sflag [#allocation3], 1
    %285 = vsyncpa %s284, 1
    %286 = vsyncpa [#allocation6], 1
    %s287 = scalar_lea.sflag [#allocation6], 1
    %288 = vsyncpa %s287, 1
    %289 = vsyncpa [#allocation4], 1
    %s290 = scalar_lea.sflag [#allocation4], 1
    %291 = vsyncpa %s290, 1

</llo_original>
